<compile_context>
chip_gen: v7x
topology: tpu7x:2x2x1
jax: 0.10.0
libtpu: 0.0.40
codegen_flags: <defaults>
</compile_context>

<pallas_src>
import functools

import jax
import jax.numpy as jnp
import numpy as np
from jax.experimental import pallas as pl
from jax.experimental.pallas import tpu as pltpu

TEMPERATURE = 0.07
BASE_TEMPERATURE = 0.07
CONTRAST_MODE = "one"  # PyTorch default


def _pick_tile(total, target, align):
    """Largest multiple of `align` that divides `total` and is <= target; else full dim."""
    if total <= target:
        return total
    t = (min(target, total) // align) * align
    while t >= align:
        if total % t == 0:
            return t
        t -= align
    return total


def _vmem_limit_bytes():
    """Generation-aware scoped-VMEM request: ~70% of physical, capped at 96 MiB."""
    cap = 64 * 1024 * 1024  # conservative fallback (v7x physical VMEM per TC)
    try:
        cap = int(pltpu.get_tpu_info().vmem_capacity_bytes)
    except Exception:
        pass
    return min(96 * 1024 * 1024, int(cap * 0.70))


def _select_tiles(N, M, D, itemsize, vmem_budget):
    """tn is the HBM-traffic knob (contrast is re-streamed N/tn times): grow it as
    far as the VMEM budget allows; tm only amortizes per-step overhead, so shrink
    tm first when VMEM-constrained."""
    sub_align = {4: 8, 2: 16, 1: 32}.get(itemsize, 8)   # dtype-aware sublane packing
    tn = _pick_tile(N, 1024, sub_align)
    tm = _pick_tile(M, 512, 128)

    def footprint(tn_, tm_):
        return ((2 * tn_ + 2 * tm_ + tn_) * D * itemsize   # dbl-buffered anchor/contrast + scaled-anchor scratch
                + 6 * tn_ * tm_ * 4                        # f32 elementwise temporaries (adc, e, masks, ...)
                + 32 * (tn_ + tm_))                        # [tn,1]/[1,tm] blocks & scratch

    budget = int(vmem_budget * 0.85)
    while footprint(tn, tm) > budget:
        if tm > 256:
            nxt = _pick_tile(M, max(128, tm // 2), 128)
            if nxt < tm:
                tm = nxt
                continue
        nxt = _pick_tile(N, max(sub_align, tn // 2), sub_align)
        if nxt < tn:
            tn = nxt
            continue
        break
    # TODO(synk): on v7x (2 TCs) prefer N//tn >= 2 so the "parallel" N axis keeps
    # both TensorCores busy (needs a reliable trace-time core-count query).
    return tn, tm


def _supcon_kernel(anchor_ref, contrast_ref, alab_ref, clab_ref, pos_ref, out_ref,
                   a_sc, m_sc, l_sc, s_sc,
                   *, inv_temp, loss_scale, tn, tm):
    # anchor_ref:   [TN, D]   features[:, 0] tile (input dtype, e.g. bf16/f32)
    # contrast_ref: [TM, D]   view-major contrast features (row m = view*bsz + batch)
    # alab_ref:     [TN, 1]   int32 anchor labels
    # clab_ref:     [1, TM]   int32 contrast labels (label[m % bsz])
    # pos_ref:      [TN, 1]   f32 precomputed positive count per anchor (pre-guard)
    # out_ref:      [TN, 1]   per-anchor-row loss
    # a_sc:         [TN, D]   anchor tile pre-scaled by 1/temperature (input dtype)
    # m_sc/l_sc/s_sc: [TN,1]  running max / masked exp-sum / sum(mask*logits)
    ni = pl.program_id(0)
    mi = pl.program_id(1)

    # ---- per-N-tile init: scale anchor once (f32 VPU pass), zero running stats
    @pl.when(mi == 0)
    def _():
        a_sc[...] = (anchor_ref[...].astype(jnp.float32)
                     * jnp.float32(inv_temp)).astype(a_sc.dtype)
        m_sc[...] = jnp.full_like(m_sc, -jnp.inf)
        l_sc[...] = jnp.zeros_like(l_sc)
        s_sc[...] = jnp.zeros_like(s_sc)

    # [TN,D] x [TM,D] -> [TN,TM] contracting the last dims (QK^T pattern), f32 acc.
    adc = jax.lax.dot_general(
        a_sc[...], contrast_ref[...],
        dimension_numbers=(((1,), (1,)), ((), ())),
        preferred_element_type=jnp.float32)

    # ---- streaming masked log-sum-exp over the contrast (M) axis ------------
    m_prev = m_sc[...]
    m_new = jnp.maximum(m_prev, jnp.max(adc, axis=1, keepdims=True))
    alpha = jnp.exp(m_prev - m_new)
    e_all = jnp.exp(adc - m_new)

    # positive mask from tiny per-tile label vectors (broadcast compare).
    pmask = alab_ref[...] == clab_ref[...]                 # [TN,1]==[1,TM] -> [TN,TM]

    # Self-column exclusion only on the few tiles that actually contain the
    # diagonal (anchor row i vs contrast column i, i.e. view 0 of the same sample).
    row0 = ni * tn
    col0 = mi * tm
    has_diag = jnp.logical_and(row0 < col0 + tm, col0 < row0 + tn)

    def _with_diag(_):
        r = row0 + jax.lax.broadcasted_iota(jnp.int32, (tn, 1), 0)
        c = col0 + jax.lax.broadcasted_iota(jnp.int32, (1, tm), 1)
        not_self = r != c                                  # broadcast -> [TN,TM]
        return (jnp.where(not_self, e_all, 0.0),
                jnp.where(jnp.logical_and(pmask, not_self), adc, 0.0))

    def _without_diag(_):
        return e_all, jnp.where(pmask, adc, 0.0)

    e, masked_adc = jax.lax.cond(has_diag, _with_diag, _without_diag, 0)

    l_sc[...] = l_sc[...] * alpha + jnp.sum(e, axis=1, keepdims=True)
    # sum_j mask*log_prob = sum_j(mask*adc) - pos*LSE (applied at finalize),
    # so only [TN,1] running sums are needed -- no [TN,TM] log_prob temporary.
    s_sc[...] += jnp.sum(masked_adc, axis=1, keepdims=True)
    m_sc[...] = m_new

    # ---- finalize per-row loss on the last M-tile ----------------------------
    @pl.when(mi == pl.num_programs(1) - 1)
    def _():
        lse = m_sc[...] + jnp.log(l_sc[...])
        pos = pos_ref[...]
        # anchors with zero positives use divisor 1 (torch's pos<1e-6 -> 1 path).
        pos_safe = jnp.where(pos < 1e-6, jnp.ones_like(pos), pos)
        mean_lpp = (s_sc[...] - pos * lse) * pl.reciprocal(pos_safe, approx=False)
        out_ref[...] = (-loss_scale) * mean_lpp


def supcon_loss(features, labels=None, mask=None,
                temperature=TEMPERATURE, base_temperature=BASE_TEMPERATURE,
                contrast_mode=CONTRAST_MODE, block_n=None, block_m=None):
    """Pallas implementation of SupConLoss.forward (contrast_mode='one')."""
    if features.ndim < 3:
        raise ValueError("`features` needs to be [bsz, n_views, ...]")
    if features.ndim > 3:
        features = features.reshape(features.shape[0], features.shape[1], -1)
    if contrast_mode != "one":
        # TODO(synk): contrast_mode='all' (anchor_feature = contrast_feature, N = M).
        raise ValueError("only contrast_mode='one' (the default) is implemented")

    bsz, n_views, dim = features.shape

    if labels is not None and mask is not None:
        raise ValueError("Cannot define both `labels` and `mask`")
    if mask is not None:
        # TODO(synk): arbitrary user-provided [bsz, bsz] mask path (needs a mask
        # tile DMA with modulo index_map); labels / SimCLR paths covered below.
        raise NotImplementedError("explicit `mask` not supported by this kernel")
    if labels is None:
        # SimCLR: mask = eye(bsz)  <=>  label equality on arange(bsz).
        labels_i32 = jnp.arange(bsz, dtype=jnp.int32)
    else:
        labels_i32 = jnp.asarray(labels).reshape(-1).astype(jnp.int32)
        if labels_i32.shape[0] != bsz:
            raise ValueError("Num of labels does not match num of features")

    N = bsz                       # anchor_count = 1 (contrast_mode='one')
    M = bsz * n_views

    anchor_feature = features[:, 0, :]                               # [N, D]
    # View-major [M, D] (row m = view*bsz + batch): matches torch.cat(
    # torch.unbind(features, 1), 0) ordering; a cheap leading-dim transpose
    # (no minor-dim swap, no extra badly-laid-out HBM pass).
    contrast_feature = jnp.transpose(features, (1, 0, 2)).reshape(M, dim)

    anchor_labels = labels_i32.reshape(N, 1)                          # [N, 1]
    contrast_labels = jnp.tile(labels_i32, (n_views,)).reshape(1, M)  # [1, M]

    # Positive count per anchor precomputed outside the kernel (tiny [N,N] op):
    # pos[n] = n_views * |{b : label[b]==label[n]}| - 1 (self column excluded).
    same = (labels_i32[:, None] == labels_i32[None, :]).astype(jnp.float32)
    pos_true = (jnp.sum(same, axis=1) * float(n_views) - 1.0).reshape(N, 1)

    itemsize = jnp.dtype(features.dtype).itemsize
    vmem_limit = _vmem_limit_bytes()
    if block_n is None or block_m is None:
        auto_tn, auto_tm = _select_tiles(N, M, dim, itemsize, vmem_limit)
    tn = block_n if block_n is not None else auto_tn
    tm = block_m if block_m is not None else auto_tm
    assert N % tn == 0 and M % tm == 0, "tile sizes must evenly divide N / M"
    assert (tn % 8 == 0 or tn == N) and (tm % 128 == 0 or tm == M), \
        "tiles must be (8,128)-aligned or span the full dimension"

    kernel = functools.partial(
        _supcon_kernel,
        inv_temp=1.0 / float(temperature),
        loss_scale=float(temperature) / float(base_temperature),
        tn=tn, tm=tm)

    cost = pl.CostEstimate(
        flops=2 * N * M * dim,
        transcendentals=N * M,
        bytes_accessed=(N // tn) * M * dim * itemsize + N * dim * itemsize + 12 * N)

    row_loss = pl.pallas_call(
        kernel,
        out_shape=jax.ShapeDtypeStruct((N, 1), jnp.float32),
        grid_spec=pltpu.PrefetchScalarGridSpec(
            num_scalar_prefetch=0,
            grid=(N // tn, M // tm),                # reduction (M) axis last
            in_specs=[
                pl.BlockSpec((tn, dim), lambda ni, mi: (ni, 0)),   # anchor tile
                pl.BlockSpec((tm, dim), lambda ni, mi: (mi, 0)),   # contrast tile
                pl.BlockSpec((tn, 1), lambda ni, mi: (ni, 0)),     # anchor labels
                pl.BlockSpec((1, tm), lambda ni, mi: (0, mi)),     # contrast labels
                pl.BlockSpec((tn, 1), lambda ni, mi: (ni, 0)),     # positive counts
            ],
            out_specs=pl.BlockSpec((tn, 1), lambda ni, mi: (ni, 0)),
            scratch_shapes=[
                pltpu.VMEM((tn, dim), features.dtype),   # anchor pre-scaled by 1/T
                pltpu.VMEM((tn, 1), jnp.float32),        # running max
                pltpu.VMEM((tn, 1), jnp.float32),        # masked exp-sum
                pltpu.VMEM((tn, 1), jnp.float32),        # sum(mask * logits)
            ]),
        compiler_params=pltpu.CompilerParams(
            dimension_semantics=("parallel", "arbitrary"),  # N sharded on v7x megacore
            vmem_limit_bytes=vmem_limit),
        cost_estimate=cost,
    )(anchor_feature, contrast_feature, anchor_labels, contrast_labels, pos_true)

    # tiny [N] reduction in plain JAX == loss.view(anchor_count, bsz).mean()
    return jnp.mean(row_loss)


def _supcon_loss_ref(features, labels=None,
                     temperature=TEMPERATURE, base_temperature=BASE_TEMPERATURE):
    """Pure-JAX reference mirroring the PyTorch forward (contrast_mode='one')."""
    bsz, n_views, _ = features.shape
    if labels is None:
        mask = jnp.eye(bsz, dtype=jnp.float32)
    else:
        labels = labels.reshape(-1, 1)
        mask = (labels == labels.T).astype(jnp.float32)
    contrast_feature = jnp.concatenate(
        [features[:, v, :] for v in range(n_views)], axis=0)
    anchor_feature = features[:, 0, :]
    adc = (anchor_feature @ contrast_feature.T) / temperature
    logits = adc - jnp.max(adc, axis=1, keepdims=True)
    mask = jnp.tile(mask, (1, n_views))
    logits_mask = 1.0 - jnp.eye(bsz, bsz * n_views, dtype=jnp.float32)
    mask = mask * logits_mask
    exp_logits = jnp.exp(logits) * logits_mask
    log_prob = logits - jnp.log(jnp.sum(exp_logits, axis=1, keepdims=True))
    pos = jnp.sum(mask, axis=1)
    pos = jnp.where(pos < 1e-6, 1.0, pos)
    mlpp = jnp.sum(mask * log_prob, axis=1) / pos
    loss = -(temperature / base_temperature) * mlpp
    return jnp.mean(loss)


if __name__ == "__main__":
    key = jax.random.PRNGKey(0)
    k1, k2, k3, k4 = jax.random.split(key, 4)

    # Case 1: supervised (labels), tiny shapes -> single-tile grid (diag branch).
    bsz, n_views, dim = 8, 2, 128
    feats = jax.random.normal(k1, (bsz, n_views, dim), dtype=jnp.float32)
    feats = feats / jnp.linalg.norm(feats, axis=-1, keepdims=True)
    labels = jax.random.randint(k2, (bsz,), 0, 3)
    loss = jax.block_until_ready(supcon_loss(feats, labels=labels))
    ref = jax.block_until_ready(_supcon_loss_ref(feats, labels=labels))
    np.testing.assert_allclose(np.asarray(loss), np.asarray(ref),
                               rtol=2e-4, atol=2e-4)

    # Case 2: unsupervised SimCLR path (labels=None -> eye mask).
    loss_u = jax.block_until_ready(supcon_loss(feats))
    ref_u = jax.block_until_ready(_supcon_loss_ref(feats))
    np.testing.assert_allclose(np.asarray(loss_u), np.asarray(ref_u),
                               rtol=2e-4, atol=2e-4)

    # Case 3: multi-tile grid (4 N-tiles x 2 M-tiles) exercising the streaming
    # masked-LSE accumulation, the pl.when init/finalize path, and BOTH the
    # diag and non-diag lax.cond branches.
    bsz2, n_views2, dim2 = 128, 2, 64
    feats2 = jax.random.normal(k3, (bsz2, n_views2, dim2), dtype=jnp.float32)
    feats2 = feats2 / jnp.linalg.norm(feats2, axis=-1, keepdims=True)
    labels2 = jax.random.randint(k4, (bsz2,), 0, 10)
    loss2 = jax.block_until_ready(
        supcon_loss(feats2, labels=labels2, block_n=32, block_m=128))
    ref2 = jax.block_until_ready(_supcon_loss_ref(feats2, labels=labels2))
    np.testing.assert_allclose(np.asarray(loss2), np.asarray(ref2),
                               rtol=1e-3, atol=1e-3)

    print("KERNEL_OK")
</pallas_src>

<mosaic_0001>
module attributes {stable_mosaic.version = 11 : i64} {
  func.func @_supcon_kernel(%arg0: i32, %arg1: i32, %arg2: memref<8x128xf32, #tpu.memory_space<vmem>>, %arg3: memref<16x128xf32, #tpu.memory_space<vmem>>, %arg4: memref<8x1xi32, #tpu.memory_space<vmem>>, %arg5: memref<1x16xi32, #tpu.memory_space<vmem>>, %arg6: memref<8x1xf32, #tpu.memory_space<vmem>>, %arg7: memref<8x1xf32, #tpu.memory_space<vmem>>, %arg8: memref<8x128xf32, #tpu.memory_space<vmem>>, %arg9: memref<8x1xf32, #tpu.memory_space<vmem>>, %arg10: memref<8x1xf32, #tpu.memory_space<vmem>>, %arg11: memref<8x1xf32, #tpu.memory_space<vmem>>) attributes {dimension_semantics = [#tpu.dimension_semantics<parallel>, #tpu.dimension_semantics<arbitrary>], iteration_bounds = array<i64: 1, 1>, scalar_prefetch = 0 : i64, scratch_operands = 4 : i64, tpu.core_type = #tpu.core_type<tc>, window_params = [{transform_indices = @transform_0, window_bounds = array<i64: 8, 128>}, {transform_indices = @transform_1, window_bounds = array<i64: 16, 128>}, {transform_indices = @transform_2, window_bounds = array<i64: 8, 1>}, {transform_indices = @transform_3, window_bounds = array<i64: 1, 16>}, {transform_indices = @transform_4, window_bounds = array<i64: 8, 1>}, {transform_indices = @transform_5, window_bounds = array<i64: 8, 1>}]} {
    %c0_i32 = arith.constant 0 : i32
    %0 = arith.cmpi eq, %arg1, %c0_i32 : i32
    %1 = arith.extui %0 : i1 to i32
    %c0_i32_0 = arith.constant 0 : i32
    %2 = arith.cmpi ne, %1, %c0_i32_0 : i32
    scf.if %2 {
      %c0_28 = arith.constant 0 : index
      %c0_29 = arith.constant 0 : index
      %45 = vector.load %arg2[%c0_28, %c0_29] : memref<8x128xf32, #tpu.memory_space<vmem>>, vector<8x128xf32>
      %cst_30 = arith.constant 14.2857141 : f32
      %46 = vector.broadcast %cst_30 : f32 to vector<8x128xf32>
      %47 = arith.mulf %45, %46 : vector<8x128xf32>
      %c0_31 = arith.constant 0 : index
      %c0_32 = arith.constant 0 : index
      %48 = vector.load %arg8[%c0_31, %c0_32] : memref<8x128xf32, #tpu.memory_space<vmem>>, vector<8x128xf32>
      tpu.vector_store %arg8[%c0_31, %c0_32], %47 {strides = array<i32>} : memref<8x128xf32, #tpu.memory_space<vmem>>, vector<8x128xf32>,
      %cst_33 = arith.constant 0xFF800000 : f32
      %49 = vector.broadcast %cst_33 : f32 to vector<8x1xf32>
      %c0_34 = arith.constant 0 : index
      %c0_35 = arith.constant 0 : index
      %50 = vector.load %arg9[%c0_34, %c0_35] : memref<8x1xf32, #tpu.memory_space<vmem>>, vector<8x1xf32>
      tpu.vector_store %arg9[%c0_34, %c0_35], %49 {strides = array<i32>} : memref<8x1xf32, #tpu.memory_space<vmem>>, vector<8x1xf32>,
      %cst_36 = arith.constant 0.000000e+00 : f32
      %51 = vector.broadcast %cst_36 : f32 to vector<8x1xf32>
      %c0_37 = arith.constant 0 : index
      %c0_38 = arith.constant 0 : index
      %52 = vector.load %arg10[%c0_37, %c0_38] : memref<8x1xf32, #tpu.memory_space<vmem>>, vector<8x1xf32>
      tpu.vector_store %arg10[%c0_37, %c0_38], %51 {strides = array<i32>} : memref<8x1xf32, #tpu.memory_space<vmem>>, vector<8x1xf32>,
      %cst_39 = arith.constant 0.000000e+00 : f32
      %53 = vector.broadcast %cst_39 : f32 to vector<8x1xf32>
      %c0_40 = arith.constant 0 : index
      %c0_41 = arith.constant 0 : index
      %54 = vector.load %arg11[%c0_40, %c0_41] : memref<8x1xf32, #tpu.memory_space<vmem>>, vector<8x1xf32>
      tpu.vector_store %arg11[%c0_40, %c0_41], %53 {strides = array<i32>} : memref<8x1xf32, #tpu.memory_space<vmem>>, vector<8x1xf32>,
    } else {
    }
    %c0 = arith.constant 0 : index
    %c0_1 = arith.constant 0 : index
    %3 = vector.load %arg8[%c0, %c0_1] : memref<8x128xf32, #tpu.memory_space<vmem>>, vector<8x128xf32>
    %c0_2 = arith.constant 0 : index
    %c0_3 = arith.constant 0 : index
    %4 = vector.load %arg3[%c0_2, %c0_3] : memref<16x128xf32, #tpu.memory_space<vmem>>, vector<16x128xf32>
    %cst = arith.constant dense<0.000000e+00> : vector<8x16xf32>
    %5 = tpu.matmul %3, %4, %cst {dimension_numbers = #tpu.dot_dimension_numbers<[1], [1], [0], [0], [0, 0, 1, 0], [], []>} : vector<8x128xf32>, vector<16x128xf32>, vector<8x16xf32> -> vector<8x16xf32>
    %c0_4 = arith.constant 0 : index
    %c0_5 = arith.constant 0 : index
    %6 = vector.load %arg9[%c0_4, %c0_5] : memref<8x1xf32, #tpu.memory_space<vmem>>, vector<8x1xf32>
    %cst_6 = arith.constant dense<0xFF800000> : vector<8xf32>
    %7 = vector.multi_reduction <maximumf>, %5, %cst_6 [1] : vector<8x16xf32> to vector<8xf32>
    %8 = vector.shape_cast %7 : vector<8xf32> to vector<8x1xf32>
    %9 = arith.maximumf %6, %8 : vector<8x1xf32>
    %10 = arith.subf %6, %9 : vector<8x1xf32>
    %11 = math.exp %10 : vector<8x1xf32>
    %12 = vector.broadcast %9 : vector<8x1xf32> to vector<8x16xf32>
    %13 = arith.subf %5, %12 : vector<8x16xf32>
    %14 = math.exp %13 : vector<8x16xf32>
    %c0_7 = arith.constant 0 : index
    %c0_8 = arith.constant 0 : index
    %15 = vector.load %arg4[%c0_7, %c0_8] : memref<8x1xi32, #tpu.memory_space<vmem>>, vector<8x1xi32>
    %c0_9 = arith.constant 0 : index
    %c0_10 = arith.constant 0 : index
    %16 = vector.load %arg5[%c0_9, %c0_10] : memref<1x16xi32, #tpu.memory_space<vmem>>, vector<1x16xi32>
    %17 = vector.broadcast %15 : vector<8x1xi32> to vector<8x16xi32>
    %18 = vector.broadcast %16 : vector<1x16xi32> to vector<8x16xi32>
    %19 = arith.cmpi eq, %17, %18 : vector<8x16xi32>
    %c8_i32 = arith.constant 8 : i32
    %20 = arith.muli %arg0, %c8_i32 : i32
    %c16_i32 = arith.constant 16 : i32
    %21 = arith.muli %arg1, %c16_i32 : i32
    %c16_i32_11 = arith.constant 16 : i32
    %22 = arith.addi %21, %c16_i32_11 : i32
    %23 = arith.cmpi slt, %20, %22 : i32
    %c8_i32_12 = arith.constant 8 : i32
    %24 = arith.addi %20, %c8_i32_12 : i32
    %25 = arith.cmpi slt, %21, %24 : i32
    %26 = arith.andi %23, %25 : i1
    %27 = arith.extui %26 : i1 to i32
    %c0_i32_13 = arith.constant 0 : i32
    %28 = arith.cmpi ne, %27, %c0_i32_13 : i32
    %29:2 = scf.if %28 -> (vector<8x16xf32>, vector<8x16xf32>) {
      %45 = tpu.iota {dimensions = array<i32: 0>} : vector<8x1xi32>
      %46 = vector.broadcast %20 : i32 to vector<8x1xi32>
      %47 = arith.addi %46, %45 : vector<8x1xi32>
      %48 = tpu.iota {dimensions = array<i32: 1>} : vector<1x16xi32>
      %49 = vector.broadcast %21 : i32 to vector<1x16xi32>
      %50 = arith.addi %49, %48 : vector<1x16xi32>
      %51 = vector.broadcast %47 : vector<8x1xi32> to vector<8x16xi32>
      %52 = vector.broadcast %50 : vector<1x16xi32> to vector<8x16xi32>
      %53 = arith.cmpi ne, %51, %52 : vector<8x16xi32>
      %cst_28 = arith.constant 0.000000e+00 : f32
      %54 = vector.broadcast %cst_28 : f32 to vector<8x16xf32>
      %55 = arith.select %53, %14, %54 : vector<8x16xi1>, vector<8x16xf32>
      %56 = arith.andi %19, %53 : vector<8x16xi1>
      %cst_29 = arith.constant 0.000000e+00 : f32
      %57 = vector.broadcast %cst_29 : f32 to vector<8x16xf32>
      %58 = arith.select %56, %5, %57 : vector<8x16xi1>, vector<8x16xf32>
      scf.yield %55, %58 : vector<8x16xf32>, vector<8x16xf32>
    } else {
      %cst_28 = arith.constant 0.000000e+00 : f32
      %45 = vector.broadcast %cst_28 : f32 to vector<8x16xf32>
      %46 = arith.select %19, %5, %45 : vector<8x16xi1>, vector<8x16xf32>
      scf.yield %14, %46 : vector<8x16xf32>, vector<8x16xf32>
    }
    %c0_14 = arith.constant 0 : index
    %c0_15 = arith.constant 0 : index
    %30 = vector.load %arg10[%c0_14, %c0_15] : memref<8x1xf32, #tpu.memory_space<vmem>>, vector<8x1xf32>
    %31 = arith.mulf %30, %11 : vector<8x1xf32>
    %cst_16 = arith.constant dense<0.000000e+00> : vector<8xf32>
    %32 = vector.multi_reduction <add>, %29#0, %cst_16 [1] : vector<8x16xf32> to vector<8xf32>
    %33 = vector.shape_cast %32 : vector<8xf32> to vector<8x1xf32>
    %34 = arith.addf %31, %33 : vector<8x1xf32>
    %c0_17 = arith.constant 0 : index
    %c0_18 = arith.constant 0 : index
    %35 = vector.load %arg10[%c0_17, %c0_18] : memref<8x1xf32, #tpu.memory_space<vmem>>, vector<8x1xf32>
    tpu.vector_store %arg10[%c0_17, %c0_18], %34 {strides = array<i32>} : memref<8x1xf32, #tpu.memory_space<vmem>>, vector<8x1xf32>,
    %c0_19 = arith.constant 0 : index
    %c0_20 = arith.constant 0 : index
    %36 = vector.load %arg11[%c0_19, %c0_20] : memref<8x1xf32, #tpu.memory_space<vmem>>, vector<8x1xf32>
    %cst_21 = arith.constant dense<0.000000e+00> : vector<8xf32>
    %37 = vector.multi_reduction <add>, %29#1, %cst_21 [1] : vector<8x16xf32> to vector<8xf32>
    %38 = vector.shape_cast %37 : vector<8xf32> to vector<8x1xf32>
    %39 = arith.addf %36, %38 : vector<8x1xf32>
    %c0_22 = arith.constant 0 : index
    %c0_23 = arith.constant 0 : index
    %40 = vector.load %arg11[%c0_22, %c0_23] : memref<8x1xf32, #tpu.memory_space<vmem>>, vector<8x1xf32>
    tpu.vector_store %arg11[%c0_22, %c0_23], %39 {strides = array<i32>} : memref<8x1xf32, #tpu.memory_space<vmem>>, vector<8x1xf32>,
    %c0_24 = arith.constant 0 : index
    %c0_25 = arith.constant 0 : index
    %41 = vector.load %arg9[%c0_24, %c0_25] : memref<8x1xf32, #tpu.memory_space<vmem>>, vector<8x1xf32>
    tpu.vector_store %arg9[%c0_24, %c0_25], %9 {strides = array<i32>} : memref<8x1xf32, #tpu.memory_space<vmem>>, vector<8x1xf32>,
    %c0_i32_26 = arith.constant 0 : i32
    %42 = arith.cmpi eq, %arg1, %c0_i32_26 : i32
    %43 = arith.extui %42 : i1 to i32
    %c0_i32_27 = arith.constant 0 : i32
    %44 = arith.cmpi ne, %43, %c0_i32_27 : i32
    scf.if %44 {
      %c0_28 = arith.constant 0 : index
      %c0_29 = arith.constant 0 : index
      %45 = vector.load %arg9[%c0_28, %c0_29] : memref<8x1xf32, #tpu.memory_space<vmem>>, vector<8x1xf32>
      %c0_30 = arith.constant 0 : index
      %c0_31 = arith.constant 0 : index
      %46 = vector.load %arg10[%c0_30, %c0_31] : memref<8x1xf32, #tpu.memory_space<vmem>>, vector<8x1xf32>
      %47 = math.log %46 : vector<8x1xf32>
      %48 = arith.addf %45, %47 : vector<8x1xf32>
      %c0_32 = arith.constant 0 : index
      %c0_33 = arith.constant 0 : index
      %49 = vector.load %arg6[%c0_32, %c0_33] : memref<8x1xf32, #tpu.memory_space<vmem>>, vector<8x1xf32>
      %cst_34 = arith.constant 9.99999997E-7 : f32
      %50 = vector.broadcast %cst_34 : f32 to vector<8x1xf32>
      %51 = arith.cmpf olt, %49, %50 : vector<8x1xf32>
      %cst_35 = arith.constant 1.000000e+00 : f32
      %52 = vector.broadcast %cst_35 : f32 to vector<8x1xf32>
      %53 = arith.select %51, %52, %49 : vector<8x1xi1>, vector<8x1xf32>
      %c0_36 = arith.constant 0 : index
      %c0_37 = arith.constant 0 : index
      %54 = vector.load %arg11[%c0_36, %c0_37] : memref<8x1xf32, #tpu.memory_space<vmem>>, vector<8x1xf32>
      %55 = arith.mulf %49, %48 : vector<8x1xf32>
      %56 = arith.subf %54, %55 : vector<8x1xf32>
      %57 = tpu.reciprocal %53 : vector<8x1xf32> -> vector<8x1xf32>
      %58 = arith.mulf %56, %57 : vector<8x1xf32>
      %cst_38 = arith.constant -1.000000e+00 : f32
      %59 = vector.broadcast %cst_38 : f32 to vector<8x1xf32>
      %60 = arith.mulf %59, %58 : vector<8x1xf32>
      %c0_39 = arith.constant 0 : index
      %c0_40 = arith.constant 0 : index
      %61 = vector.load %arg7[%c0_39, %c0_40] : memref<8x1xf32, #tpu.memory_space<vmem>>, vector<8x1xf32>
      tpu.vector_store %arg7[%c0_39, %c0_40], %60 {strides = array<i32>} : memref<8x1xf32, #tpu.memory_space<vmem>>, vector<8x1xf32>,
    } else {
    }
    return
  }
  func.func @transform_0(%arg0: i32, %arg1: i32) -> (i32, i32) {
    %c0_i32 = arith.constant 0 : i32
    %c0_i32_0 = arith.constant 0 : i32
    return %arg0, %c0_i32 : i32, i32
  }
  func.func @transform_1(%arg0: i32, %arg1: i32) -> (i32, i32) {
    %c0_i32 = arith.constant 0 : i32
    %c0_i32_0 = arith.constant 0 : i32
    return %arg1, %c0_i32 : i32, i32
  }
  func.func @transform_2(%arg0: i32, %arg1: i32) -> (i32, i32) {
    %c0_i32 = arith.constant 0 : i32
    %c0_i32_0 = arith.constant 0 : i32
    return %arg0, %c0_i32 : i32, i32
  }
  func.func @transform_3(%arg0: i32, %arg1: i32) -> (i32, i32) {
    %c0_i32 = arith.constant 0 : i32
    %c0_i32_0 = arith.constant 0 : i32
    return %c0_i32, %arg1 : i32, i32
  }
  func.func @transform_4(%arg0: i32, %arg1: i32) -> (i32, i32) {
    %c0_i32 = arith.constant 0 : i32
    %c0_i32_0 = arith.constant 0 : i32
    return %arg0, %c0_i32 : i32, i32
  }
  func.func @transform_5(%arg0: i32, %arg1: i32) -> (i32, i32) {
    %c0_i32 = arith.constant 0 : i32
    %c0_i32_0 = arith.constant 0 : i32
    return %arg0, %c0_i32 : i32, i32
  }
}

</mosaic_0001>

<llo_original>
// kernel: tpu_custom_call.1
$region0: #{tpu_custom_call.1}
  #allocation0 [shape = 'u32[]', space=smem, size = 0x4, offset = 0x4, fixed_abs, tag = 'smem constant byte address 0x4 - core index']
  #allocation1 [shape = 'u32[144,128]{1,0:T(1,128)}', space=vmem, size = 0x12000, scoped, tag = 'internal scratch']
  #allocation2 [shape = 'f32[8,128]{1,0:T(8,128)}', space=vmem, size = 0x1000, scoped, tag = 'scratch operand']
  #allocation3 [shape = 'f32[8,1]{1,0:T(8,128)}', space=vmem, size = 0x1000, scoped, tag = 'scratch operand']
  #allocation4 [shape = 'f32[8,1]{1,0:T(8,128)}', space=vmem, size = 0x1000, scoped, tag = 'scratch operand']
  #allocation5 [shape = 'f32[8,1]{1,0:T(8,128)}', space=vmem, size = 0x1000, scoped, tag = 'scratch operand']
  %s0 = inlined_call_operand.hbm [shape: f32[8,128], index: 0, kind: input, shape index: {}]
  %s1 = inlined_call_operand.vmem [shape: f32[16,128], index: 1, kind: input, shape index: {}]
  %s2 = inlined_call_operand.vmem [shape: s32[8,1], index: 2, kind: input, shape index: {}]
  %s3 = inlined_call_operand.vmem [shape: s32[1,16], index: 3, kind: input, shape index: {}]
  %s4 = inlined_call_operand.vmem [shape: f32[8,1], index: 4, kind: input, shape index: {}]
  %s5 = inlined_call_operand.vmem [shape: f32[8,1], index: 5, kind: output, shape index: {}]
  %s6 = sld [smem:[#allocation0]]
  $region50: #{tpu_custom_call.1} parent=0
    _
  %s8 = ssub.s32 1, %s6
  %s9 = scalar_select 0, %s8, %s6
  $region1: #{tpu_custom_call.1} parent=0
    #allocation6 [shape = 'u8[4096]{0}', space=vmem, size = 0x1000, scoped, tag = 'input window, operand 0, single buffered']
    #allocation7 [shape = 's32[1]{0}', space=sflag, size = 0x4, scoped, tag = 'scoped memory for tpu_custom_call.1']
    %10 = vsyncpa [#allocation7], 0
    // Predicated region
    $region2: #{tpu_custom_call.1} parent=1 // pred_check
      _
    $region3: #{tpu_custom_call.1} parent=1 // pred_check_branch
      %12 = sbr.rel (0) target = $region5
    $region4: #{tpu_custom_call.1} parent=1 // pred_region
      %s14 = ssub.s32 128, 128
      %15 = vsyncadd [#allocation7], %s14
      %s17 = sshll.u32 [#allocation6], 4
      %s18 = int_to_ptr.vmem [resolvable:$true] %s17
      %20 = dma.hbm_to_vmem [thread:$0]  %s0, 128, %s18, [#allocation7]
    $region5: #{tpu_custom_call.1} parent=1 // pred_fallthru
      _
    // Predicated region
    $region6: #{tpu_custom_call.1} parent=1 // pred_check
      _
    $region7: #{tpu_custom_call.1} parent=1 // pred_check_branch
      %22 = sbr.rel (0) target = $region9
    $region8: #{tpu_custom_call.1} parent=1 // pred_region
      _
    $region9: #{tpu_custom_call.1} parent=1 // pred_fallthru
      _
    // Predicated region
    $region10: #{tpu_custom_call.1} parent=1 // pred_check
      _
    $region11: #{tpu_custom_call.1} parent=1 // pred_check_branch
      %24 = sbr.rel (0) target = $region13
    $region12: #{tpu_custom_call.1} parent=1 // pred_region
      _
    $region13: #{tpu_custom_call.1} parent=1 // pred_fallthru
      _
    // Predicated region
    $region14: #{tpu_custom_call.1} parent=1 // pred_check
      _
    $region15: #{tpu_custom_call.1} parent=1 // pred_check_branch
      %26 = sbr.rel (0) target = $region17
    $region16: #{tpu_custom_call.1} parent=1 // pred_region
      _
    $region17: #{tpu_custom_call.1} parent=1 // pred_fallthru
      _
    // Predicated region
    $region18: #{tpu_custom_call.1} parent=1 // pred_check
      _
    $region19: #{tpu_custom_call.1} parent=1 // pred_check_branch
      %28 = sbr.rel (0) target = $region21
    $region20: #{tpu_custom_call.1} parent=1 // pred_region
      _
    $region21: #{tpu_custom_call.1} parent=1 // pred_fallthru
      _
    // Predicated region
    $region22: #{tpu_custom_call.1} parent=1 // pred_check
      _
    $region23: #{tpu_custom_call.1} parent=1 // pred_check_branch
      %30 = sbr.rel (0) target = $region25
    $region24: #{tpu_custom_call.1} parent=1 // pred_region
      %31 = dma.done [#allocation7], 128
    $region25: #{tpu_custom_call.1} parent=1 // pred_fallthru
      _
    %p32 = scmp.eq.s32.totalorder 0, 0
    // Predicated region
    $region26: #{tpu_custom_call.1} parent=1 // pred_check
      %p33 = pneg %p32
    $region27: #{tpu_custom_call.1} parent=1 // pred_check_branch
      %35 = sbr.rel (%p33) target = $region29
    $region28: #{tpu_custom_call.1} parent=1 // pred_region
      %v36 = vld [vmem:[#allocation6] sm:$0xff]
      %v37 = vmul.f32 %v36, 14.285714
      %38 = vst [vmem:[#allocation2] sm:$0xff] %v37
      %vm39 = vcmask 7168
      %40 = vst.msk [vmem:[#allocation3] sm:$0xff] %vm39, -inf
      %41 = vst.msk [vmem:[#allocation4] sm:$0xff] %vm39, 0.0
      %42 = vst.msk [vmem:[#allocation5] sm:$0xff] %vm39, 0.0
    $region29: #{tpu_custom_call.1} parent=1 // pred_fallthru
      _
    %v43 = vld [vmem:[#allocation2] sm:$0xff]
    %v44 = vld [vmem:[%s1] sm:$0xff]
    %v45 = vld [vmem:[%s1 + $0x8] sm:$0xff]
    %46 = vmatprep.subr.mxu0 0.0
    %47 = vmatpush1.xpose.msra.mxu0 %v44
    %48 = vmatprep.subr.mxu0 0.0
    %49 = vmatpush1.xpose.msra.mxu0 %v45
    %50 = vmatprep.subr.mxu0 0.0
    %51 = vmatpush1.xpose.msra.mxu0 0.0
    %52 = vmatprep.subr.mxu0 0.0
    %53 = vmatpush1.xpose.msra.mxu0 0.0
    %54 = vmatprep.subr.mxu0 0.0
    %55 = vmatpush1.xpose.msra.mxu0 0.0
    %56 = vmatprep.subr.mxu0 0.0
    %57 = vmatpush1.xpose.msra.mxu0 0.0
    %58 = vmatprep.subr.mxu0 0.0
    %59 = vmatpush1.xpose.msra.mxu0 0.0
    %60 = vmatprep.subr.mxu0 0.0
    %61 = vmatpush1.xpose.msra.mxu0 0.0
    %62 = vmatprep.subr.mxu0 0.0
    %63 = vmatpush1.xpose.msra.mxu0 0.0
    %64 = vmatprep.subr.mxu0 0.0
    %65 = vmatpush1.xpose.msra.mxu0 0.0
    %66 = vmatprep.subr.mxu0 0.0
    %67 = vmatpush1.xpose.msra.mxu0 0.0
    %68 = vmatprep.subr.mxu0 0.0
    %69 = vmatpush1.xpose.msra.mxu0 0.0
    %70 = vmatprep.subr.mxu0 0.0
    %71 = vmatpush1.xpose.msra.mxu0 0.0
    %72 = vmatprep.subr.mxu0 0.0
    %73 = vmatpush1.xpose.msra.mxu0 0.0
    %74 = vmatprep.subr.mxu0 0.0
    %75 = vmatpush1.xpose.msra.mxu0 0.0
    %76 = vmatprep.subr.mxu0 0.0
    %77 = vmatpush1.xpose.msra.mxu0 0.0
    %78 = vmatprep.subr.mxu0 0.0
    %79 = vmatpush1.xpose.msra.mxu0 0.0
    %80 = vmatprep.subr.mxu0 0.0
    %81 = vmatpush1.xpose.msra.mxu0 0.0
    %82 = vmatprep.subr.mxu0 0.0
    %83 = vmatpush1.xpose.msra.mxu0 0.0
    %84 = vmatprep.subr.mxu0 0.0
    %85 = vmatpush1.xpose.msra.mxu0 0.0
    %86 = vmatprep.subr.mxu0 0.0
    %87 = vmatpush1.xpose.msra.mxu0 0.0
    %88 = vmatprep.subr.mxu0 0.0
    %89 = vmatpush1.xpose.msra.mxu0 0.0
    %90 = vmatprep.subr.mxu0 0.0
    %91 = vmatpush1.xpose.msra.mxu0 0.0
    %92 = vmatprep.subr.mxu0 0.0
    %93 = vmatpush1.xpose.msra.mxu0 0.0
    %94 = vmatprep.subr.mxu0 0.0
    %95 = vmatpush1.xpose.msra.mxu0 0.0
    %96 = vmatprep.subr.mxu0 0.0
    %97 = vmatpush1.xpose.msra.mxu0 0.0
    %98 = vmatprep.subr.mxu0 0.0
    %99 = vmatpush1.xpose.msra.mxu0 0.0
    %100 = vmatprep.subr.mxu0 0.0
    %101 = vmatpush1.xpose.msra.mxu0 0.0
    %102 = vmatprep.subr.mxu0 0.0
    %103 = vmatpush1.xpose.msra.mxu0 0.0
    %104 = vmatprep.subr.mxu0 0.0
    %105 = vmatpush1.xpose.msra.mxu0 0.0
    %106 = vmatprep.subr.mxu0 0.0
    %107 = vmatpush1.xpose.msra.mxu0 0.0
    %108 = vmatprep.subr.mxu0 0.0
    %109 = vmatpush1.xpose.msra.mxu0 0.0
    %110 = vmatprep.mubr.f32.mxu0 0.0
    %111 = vmatmul.mubr.f32.gmra.mrb[0].mxu0 %v43
    %v112 = vpop.f32.mrb[0].mxu0
    %v113 = vadd.f32 0.0, %v112
    %v114 = vpop.f32.mrb[0].mxu0
    %115 = vdwg.mxu0
    %v116 = vld [vmem:[#allocation3] sm:$0xff]
    %vm117 = vcmask 130048
    %v118 = vsel %vm117, %v113, -inf
    %119 = vmax.xlane.f32.xlu0 %v118
    %v120 = vpop.xlane.xlu0 %119
    %v121 = vmax.f32 %v116, %v120
    %v122 = vsub.f32 %v116, %v121
    %v123 = vmul.f32 %v122, 1.442695
    %v124 = vpow.pop %v123
    %126 = vset.pattern.permute.xlu0 0
    %127 = vperm.xlu0 %126, %v121
    %v128 = vpop.permute.xlu0 %127
    %v130 = vsub.f32 %v113, %v128
    %v131 = vmul.f32 %v130, 1.442695
    %v132 = vpow.pop %v131
    %v133 = vld [vmem:[%s2] sm:$0xff]
    %v134 = vld [vmem:[%s3] sm:$0x1]
    %135 = vset.pattern.permute.xlu0 0
    %136 = vperm.xlu0 %135, %v133
    %v137 = vpop.permute.xlu0 %136
    %v138 = vlaneseq
    %v139 = vshrl.u32 %v138, 7
    %v140 = vsub.s32 0, %v139
    %v141 = vrot.slane %v134, %v140
    %vm142 = vcmp.eq.s32.totalorder %v137, %v141
    %s143 = smul.u32 0, 8
    %s144 = smul.u32 0, 16
    %s145 = sadd.s32 %s144, 16
    %p146 = scmp.lt.s32.totalorder %s143, %s145
    %s147 = sadd.s32 %s143, 8
    %p148 = scmp.lt.s32.totalorder %s144, %s147
    %p149 = pnand %p146, %p148
    %p150 = pneg %p149
    // Predicated region
    $region30: #{tpu_custom_call.1} parent=1 // pred_check
      _
    $region31: #{tpu_custom_call.1} parent=1 // pred_check_branch
      %152 = sbr.rel (%p149) target = $region33
    $region32: #{tpu_custom_call.1} parent=1 // pred_region
      %v153 = vlaneseq
      %v154 = vshrl.u32 %v153, 7
      %v155 = vstv %s143
      %v156 = vadd.s32 %v155, %v154
      %v157 = vlaneseq
      %v158 = vand.u32 %v157, 127
      %v159 = vstv %s144
      %v160 = vadd.s32 %v159, %v158
      %vm161 = vcmp.ne.s32.totalorder %v156, %v160
      %v162 = vsel %vm161, %v132, 0.0
      %vm163 = vmand %vm142, %vm161
      %v164 = vsel %vm163, %v113, 0.0
    $region33: #{tpu_custom_call.1} parent=1 // pred_fallthru
      %v165 = vphi 0, %v162
      %v166 = vphi 0, %v164
    // Predicated region
    $region34: #{tpu_custom_call.1} parent=1 // pred_check
      %p167 = pneg %p149
    $region35: #{tpu_custom_call.1} parent=1 // pred_check_branch
      %169 = sbr.rel (%p167) target = $region37
    $region36: #{tpu_custom_call.1} parent=1 // pred_region
      %v170 = vsel %vm142, %v113, 0.0
    $region37: #{tpu_custom_call.1} parent=1 // pred_fallthru
      %v171 = vphi %v165, %v132
      %v172 = vphi %v166, %v170
    %v173 = vld [vmem:[#allocation4] sm:$0xff]
    %v174 = vmul.f32 %v173, %v124
    %v175 = vsel %vm117, %v171, 0.0
    %176 = vadd.xlane.f32.xlu0 %v175
    %v177 = vpop.xlane.xlu0 %176
    %v178 = vadd.f32 %v174, %v177
    %vm179 = vcmask 7168
    %180 = vst.msk [vmem:[#allocation4] sm:$0xff] %vm179, %v178
    %v181 = vld [vmem:[#allocation5] sm:$0xff]
    %v182 = vsel %vm117, %v172, 0.0
    %183 = vadd.xlane.f32.xlu0 %v182
    %v184 = vpop.xlane.xlu0 %183
    %v185 = vadd.f32 %v181, %v184
    %186 = vst.msk [vmem:[#allocation5] sm:$0xff] %vm179, %v185
    %187 = vst.msk [vmem:[#allocation3] sm:$0xff] %vm179, %v121
    // Predicated region
    $region38: #{tpu_custom_call.1} parent=1 // pred_check
      %p188 = pneg %p32
    $region39: #{tpu_custom_call.1} parent=1 // pred_check_branch
      %190 = sbr.rel (%p188) target = $region41
    $region40: #{tpu_custom_call.1} parent=1 // pred_region
      %v191 = vld [vmem:[#allocation3] sm:$0xff]
      %v192 = vld [vmem:[#allocation4] sm:$0xff]
      %v193 = vlog2.pop %v192
      %v194 = vmul.f32 %v193, 0.6931472
      %v195 = vadd.f32 %v191, %v194
      %v196 = vld [vmem:[%s4] sm:$0xff]
      %vm197 = vcmp.lt.f32.partialorder %v196, 1e-06
      %v198 = vsel %vm197, 1.0, %v196
      %v199 = vld [vmem:[#allocation5] sm:$0xff]
      %v200 = vmul.f32 %v196, %v195
      %v201 = vsub.f32 %v199, %v200
      %v202 = vrcp.pop %v198
      %v203 = vmul.f32 %v201, %v202
      %v204 = vmul.f32 %v203, -1.0
      %205 = vst.msk [vmem:[%s5] sm:$0xff] %vm179, %v204
    $region41: #{tpu_custom_call.1} parent=1 // pred_fallthru
      _
    // Predicated region
    $region42: #{tpu_custom_call.1} parent=1 // pred_check
      _
    $region43: #{tpu_custom_call.1} parent=1 // pred_check_branch
      %207 = sbr.rel (0) target = $region45
    $region44: #{tpu_custom_call.1} parent=1 // pred_region
      _
    $region45: #{tpu_custom_call.1} parent=1 // pred_fallthru
      _
    // Predicated region
    $region46: #{tpu_custom_call.1} parent=1 // pred_check
      _
    $region47: #{tpu_custom_call.1} parent=1 // pred_check_branch
      %209 = sbr.rel (0) target = $region49
    $region48: #{tpu_custom_call.1} parent=1 // pred_region
      _
    $region49: #{tpu_custom_call.1} parent=1 // pred_fallthru
      _
    %210 = vsyncpa [#allocation7], 1

</llo_original>
